<compile_context>
chip_gen: v5e
topology: v5e:2x2
jax: 0.10.0
libtpu: 0.0.40
codegen_flags: <defaults>
</compile_context>

<pallas_src>
import jax
import jax.numpy as jnp
from jax.experimental import pallas as pl
from jax.experimental.pallas import tpu as pltpu


# ---------------------------------------------------------------------------
# Pallas identity-copy kernel (only used on the optional materialized path).
# ---------------------------------------------------------------------------

_LANE_WIDTH = 1024            # 8 * 128 lanes per row -> lane-dense, unmasked stores
_TARGET_BLOCK_BYTES = 2 << 20  # ~2 MiB per block; 2 in-bufs + 2 out-bufs ~= 8 MiB VMEM
_PALLAS_MIN_BYTES = 256 * 1024  # below this, a kernel launch is pure overhead


def _identity_kernel(x_ref, o_ref):
    # Straight VMEM copy of the current lane-dense tile.
    o_ref[...] = x_ref[...]


@jax.jit
def _pallas_identity_copy(x: jax.Array) -> jax.Array:
    """Materialized identity copy through a tiled, lane-dense Pallas kernel."""
    orig_shape = x.shape
    n = x.size
    itemsize = x.dtype.itemsize

    flat = x.reshape(-1)

    # Lane-dense 2D view: (rows, 1024).  The tail is padded up to a full row.
    rows = pl.cdiv(n, _LANE_WIDTH)
    max_block_rows = max(32, _TARGET_BLOCK_BYTES // (_LANE_WIDTH * itemsize))

    if rows <= max_block_rows:
        # Single full-extent block (exempt from the (8,128) divisibility rule).
        grid_rows = 1
        block_rows = rows
    else:
        # Tile the row axis; round the block to a multiple of 32 sublanes so it
        # is layout-legal for every dtype width (f32/bf16/int8/fp8).
        grid_rows = pl.cdiv(rows, max_block_rows)
        block_rows = pl.cdiv(rows, grid_rows)
        block_rows = ((block_rows + 31) // 32) * 32
        rows = grid_rows * block_rows  # pad rows to an exact grid multiple

    padded_n = rows * _LANE_WIDTH
    if padded_n != n:
        flat = jnp.pad(flat, (0, padded_n - n))
    x2d = flat.reshape(rows, _LANE_WIDTH)

    out2d = pl.pallas_call(
        _identity_kernel,
        out_shape=jax.ShapeDtypeStruct((rows, _LANE_WIDTH), x.dtype),
        grid=(grid_rows,),
        in_specs=[pl.BlockSpec((block_rows, _LANE_WIDTH), lambda i: (i, 0))],
        out_specs=pl.BlockSpec((block_rows, _LANE_WIDTH), lambda i: (i, 0)),
        # Output aliases the staged input buffer -> no second HBM allocation.
        input_output_aliases={0: 0},
        compiler_params=pltpu.CompilerParams(
            dimension_semantics=("parallel",)),
    )(x2d)

    return out2d.reshape(-1)[:n].reshape(orig_shape)


def pallas_identity(x: jax.Array, *, min_bytes: int = _PALLAS_MIN_BYTES) -> jax.Array:
    """Identity; routes large arrays through the Pallas copy, passes small ones through."""
    nbytes = x.size * x.dtype.itemsize
    if x.size == 0 or nbytes < min_bytes:
        return x
    return _pallas_identity_copy(x)


# ---------------------------------------------------------------------------
# Module port.
# ---------------------------------------------------------------------------

class ExtractOutputKeys:
    """JAX/Pallas port of `extract_output_keys`.

    forward(inputs) -> inputs.  The default path is a true zero-copy
    pass-through (identical semantics + zero HBM traffic).  With
    `materialize=True`, tensors are copied on-device through the Pallas
    identity kernel (tiny tensors below `min_bytes` still bypass Pallas).
    """

    def __init__(self, output_key: str = "scalar_representation",
                 per_atom_output_key: str | None = None,
                 materialize: bool = False,
                 min_bytes: int = _PALLAS_MIN_BYTES):
        self.output_key = output_key
        self.model_outputs = [output_key]
        self.per_atom_output_key = per_atom_output_key
        if self.per_atom_output_key is not None:
            self.model_outputs.append(self.per_atom_output_key)
        self.materialize = materialize
        self.min_bytes = min_bytes

    def __call__(self, inputs: dict[str, jax.Array]) -> dict[str, jax.Array]:
        if not self.materialize:
            # Exact PyTorch semantics: return the inputs dict unchanged.
            return inputs
        return {k: pallas_identity(v, min_bytes=self.min_bytes)
                for k, v in inputs.items()}


# ---------------------------------------------------------------------------
# Demo / validation.
# ---------------------------------------------------------------------------

if __name__ == "__main__":
    key = jax.random.PRNGKey(0)
    k1, k2, k3 = jax.random.split(key, 3)

    # Small, module-consistent shapes: batch of 2 molecules, 8 atoms each,
    # hidden size 32 for the scalar representation; plus per-atom scalars.
    n_atoms = 2 * 8
    hidden = 32
    inputs = {
        "scalar_representation": jax.random.normal(k1, (n_atoms, hidden),
                                                   dtype=jnp.float32),
        "energy_per_atom": jax.random.normal(k2, (n_atoms,), dtype=jnp.float32),
        "positions": jax.random.normal(k3, (n_atoms, 3), dtype=jnp.float32),
    }

    # (1) Default path: true zero-copy pass-through (matches PyTorch forward).
    module = ExtractOutputKeys(output_key="scalar_representation",
                               per_atom_output_key="energy_per_atom")
    outputs = module(inputs)
    jax.block_until_ready(outputs)
    assert outputs is inputs
    for k in inputs:
        assert outputs[k] is inputs[k]

    # (2) Materialized path: force every tensor through the Pallas copy kernel
    #     (bypass threshold disabled) and verify exact bitwise identity.
    module_mat = ExtractOutputKeys(output_key="scalar_representation",
                                   per_atom_output_key="energy_per_atom",
                                   materialize=True, min_bytes=0)
    outputs_mat = module_mat(inputs)
    jax.block_until_ready(outputs_mat)
    for k in inputs:
        assert outputs_mat[k].shape == inputs[k].shape
        assert outputs_mat[k].dtype == inputs[k].dtype
        assert bool(jnp.all(outputs_mat[k] == inputs[k]))

    print("KERNEL_OK")
</pallas_src>

<mosaic_0001>
module attributes {stable_mosaic.version = 11 : i64} {
  func.func @_identity_kernel(%arg0: i32, %arg1: memref<1x1024xf32, #tpu.memory_space<vmem>>, %arg2: memref<1x1024xf32, #tpu.memory_space<vmem>>) attributes {dimension_semantics = [#tpu.dimension_semantics<parallel>], iteration_bounds = array<i64: 1>, scalar_prefetch = 0 : i64, scratch_operands = 0 : i64, tpu.core_type = #tpu.core_type<tc>, window_params = [{transform_indices = @transform_0, window_bounds = array<i64: 1, 1024>}, {transform_indices = @transform_1, window_bounds = array<i64: 1, 1024>}]} {
    %c0 = arith.constant 0 : index
    %c0_0 = arith.constant 0 : index
    %0 = vector.load %arg1[%c0, %c0_0] : memref<1x1024xf32, #tpu.memory_space<vmem>>, vector<1x1024xf32>
    %c0_1 = arith.constant 0 : index
    %c0_2 = arith.constant 0 : index
    %1 = vector.load %arg2[%c0_1, %c0_2] : memref<1x1024xf32, #tpu.memory_space<vmem>>, vector<1x1024xf32>
    tpu.vector_store %arg2[%c0_1, %c0_2], %0 {strides = array<i32>} : memref<1x1024xf32, #tpu.memory_space<vmem>>, vector<1x1024xf32>,
    return
  }
  func.func @transform_0(%arg0: i32) -> (i32, i32) {
    %c0_i32 = arith.constant 0 : i32
    %c0_i32_0 = arith.constant 0 : i32
    return %arg0, %c0_i32 : i32, i32
  }
  func.func @transform_1(%arg0: i32) -> (i32, i32) {
    %c0_i32 = arith.constant 0 : i32
    %c0_i32_0 = arith.constant 0 : i32
    return %arg0, %c0_i32 : i32, i32
  }
}

</mosaic_0001>

<llo_original>
// kernel: _pallas_identity_copy.1
$region0: #{_pallas_identity_copy.1}
  #allocation0 [shape = 'u32[]', space=smem, size = 0x4, offset = 0x4, fixed_abs, tag = 'smem constant byte address 0x4 - core index']
  #allocation1 [shape = 'u32[72,128]{1,0:T(1,128)}', space=vmem, size = 0x9000, scoped, tag = 'internal scratch']
  %s0 = inlined_call_operand.vmem [shape: f32[1,1024], index: 0, kind: input, shape index: {}, may-alias: {0,1}]
  %s1 = inlined_call_operand.vmem [shape: f32[1,1024], index: 1, kind: output, shape index: {}, may-alias: {0,1}]
  %s2 = sld [smem:[#allocation0]]
  $region14: #{_pallas_identity_copy.1} parent=0
    _
  %s4 = ssub.s32 1, %s2
  %s5 = scalar_select 0, %s4, %s2
  // Predicated region
  $region2: #{_pallas_identity_copy.1} parent=0 // pred_check
    _
  $region3: #{_pallas_identity_copy.1} parent=0 // pred_check_branch
    %7 = sbr.rel (0) target = $region5
  $region4: #{_pallas_identity_copy.1} parent=0 // pred_region
    _
  $region5: #{_pallas_identity_copy.1} parent=0 // pred_fallthru
    _
  %v8 = vld [vmem:[%s0] sm:$0xff]
  %9 = vst [vmem:[%s1] sm:$0xff] %v8
  // Predicated region
  $region6: #{_pallas_identity_copy.1} parent=0 // pred_check
    _
  $region7: #{_pallas_identity_copy.1} parent=0 // pred_check_branch
    %11 = sbr.rel (0) target = $region9
  $region8: #{_pallas_identity_copy.1} parent=0 // pred_region
    _
  $region9: #{_pallas_identity_copy.1} parent=0 // pred_fallthru
    _
  // Predicated region
  $region10: #{_pallas_identity_copy.1} parent=0 // pred_check
    _
  $region11: #{_pallas_identity_copy.1} parent=0 // pred_check_branch
    %13 = sbr.rel (0) target = $region13
  $region12: #{_pallas_identity_copy.1} parent=0 // pred_region
    _
  $region13: #{_pallas_identity_copy.1} parent=0 // pred_fallthru
    _

</llo_original>
